<compile_context>
chip_gen: v7x
topology: tpu7x:2x2x1
jax: 0.10.0
libtpu: 0.0.40
codegen_flags: <defaults>
</compile_context>

<pallas_src>
import functools

import jax
import jax.numpy as jnp
from jax.experimental import pallas as pl
from jax.experimental.pallas import tpu as pltpu


def _vmem_capacity_bytes(default=64 * 1024 * 1024):
    """Best-effort per-core VMEM capacity query; conservative default."""
    try:
        info = pltpu.get_tpu_info()
        for name in ("vmem_capacity_bytes", "vmem_size_bytes", "vmem_bytes"):
            cap = getattr(info, name, None)
            if cap:
                return int(cap)
    except Exception:
        pass
    return default


def _tv_kernel(x_ref, wmask_ref, out_ref, *, L, Lp, W, N, TBC, ragged):
    # x_ref: (TBC, Lp) block; each sublane-row is Ht image rows (L = Ht*W real
    # elements, zero lane-padding up to Lp).
    x = x_ref[...].astype(jnp.float32)      # in-register upcast; HBM stays narrow

    if ragged:
        # Cheap (TBC, 1) row-validity guard (no full-block int32 iota): zero
        # padded plane-rows BEFORE the diffs so unspecified padding (even NaN)
        # never reaches the sums.
        row = jax.lax.broadcasted_iota(jnp.int32, (TBC, 1), 0)
        valid = (pl.program_id(0) * TBC + row) < N
        x = jnp.where(valid, x, 0.0)

    # W direction: right neighbour is 1 lane over; mask kills row-boundary /
    # wrap-around / padding pairs.
    if W > 1:
        x_w = pltpu.roll(x, Lp - 1, axis=1)          # x_w[k] == x[(k + 1) % Lp]
        w_part = jnp.sum(jnp.abs(x_w - x) * wmask_ref[...])
    else:
        w_part = jnp.zeros((), jnp.float32)

    # H direction: lower neighbour is W lanes over; mask is a plain compare,
    # generated in-kernel (VPU has large slack in this HBM-bound kernel).
    if L > W:
        col = jax.lax.broadcasted_iota(jnp.int32, (1, Lp), 1)
        hmask = (col < (L - W)).astype(jnp.float32)
        x_h = pltpu.roll(x, Lp - W, axis=1)          # x_h[k] == x[(k + W) % Lp]
        h_part = jnp.sum(jnp.abs(x_h - x) * hmask)
    else:
        h_part = jnp.zeros((), jnp.float32)

    # Merged per-block partials: one (1, 2) SMEM writeback per step.
    out_ref[0, 0] = h_part
    out_ref[0, 1] = w_part


def tvl1_loss(x, tvloss_weight=1.0, *, _block_elems_override=None):
    """Pallas implementation of TVL1.forward for NCHW input x."""
    B, C, H, W = x.shape
    BC, HW = B * C, H * W
    count_h = C * (H - 1) * W               # _tensor_size(x[..., 1:, :])
    count_w = C * H * (W - 1)               # _tensor_size(x[..., :, 1:])
    # NOTE: H == 1 or W == 1 gives count_* == 0 -> inf/nan, matching PyTorch.

    itemsize = jnp.dtype(x.dtype).itemsize

    # ---- generation-aware block budget -------------------------------------
    small_vmem = _vmem_capacity_bytes() <= 64 * 1024 * 1024   # v7x per-TC
    f32_block_cap = (4 if small_vmem else 8) * 1024 * 1024    # f32 bytes of x per block
    vmem_limit = (48 if small_vmem else 96) * 1024 * 1024
    if _block_elems_override:
        elems_per_block = int(_block_elems_override)          # test/debug knob
    else:
        elems_per_block = max(1024, f32_block_cap // 4)

    # ---- H-tiling: split each plane into n_ct chunks of Ht image rows so at
    # least 8 sublane-rows fit the per-block budget (layout-legal blocks even
    # for 1080p/4K planes). ---------------------------------------------------
    max_L = max(W, elems_per_block // 8)
    n_ct = 1
    if HW > max_L:
        n_ct = H
        for d in range(2, H + 1):
            if H % d == 0 and (H // d) * W <= max_L:
                n_ct = d
                break
        # TODO(synk): planes with a single row wider than the budget would need
        # an additional W-tiling axis; unrealistic for image data, not handled.
    Ht = H // n_ct
    L = Ht * W
    N = BC * n_ct

    # Lane-dense view (free reshape), zero-padded to a lane multiple so rolls
    # and BlockSpecs are aligned for any W.
    Lp = ((L + 127) // 128) * 128
    x2d = x.reshape(N, L)
    if Lp != L:
        x2d = jnp.pad(x2d, ((0, 0), (0, Lp - L)))

    # ---- plane-chunk blocking ----------------------------------------------
    tbc = min(N, max(1, elems_per_block // Lp))
    if tbc < N:
        tbc = max(8, (tbc // 8) * 8)          # sublane-legal partial blocks
    if tbc >= N:
        tbc = N
        if N >= 16:
            # >= 2 blocks so the "parallel" axis can shard across v7x's 2 TCs
            # (free on v5e/v6e).  Result is a multiple of 8 and < N.
            tbc = ((((N + 1) // 2) + 7) // 8) * 8
    num_blocks = pl.cdiv(N, tbc)
    ragged = (num_blocks * tbc != N)

    # w-direction validity mask, precomputed once (avoids in-kernel integer
    # modulo); constant block index -> fetched a single time.
    col = jnp.arange(Lp, dtype=jnp.int32)
    w_mask = (((col % W) != (W - 1)) & (col < L)).astype(jnp.float32)
    w_mask = w_mask.reshape(1, Lp)

    kernel = functools.partial(
        _tv_kernel, L=L, Lp=Lp, W=W, N=N, TBC=tbc, ragged=ragged)

    cost = pl.CostEstimate(
        flops=8 * N * L,
        transcendentals=0,
        bytes_accessed=N * Lp * itemsize + Lp * 4 + num_blocks * 2 * 4,
    )

    parts = pl.pallas_call(
        kernel,
        out_shape=jax.ShapeDtypeStruct((num_blocks, 2), jnp.float32),
        grid_spec=pltpu.PrefetchScalarGridSpec(
            num_scalar_prefetch=0,
            grid=(num_blocks,),
            in_specs=[
                pl.BlockSpec((tbc, Lp), lambda i: (i, 0)),
                pl.BlockSpec((1, Lp), lambda i: (0, 0)),
            ],
            out_specs=pl.BlockSpec((1, 2), lambda i: (i, 0),
                                   memory_space=pltpu.SMEM),
        ),
        compiler_params=pltpu.CompilerParams(
            dimension_semantics=("parallel",),
            vmem_limit_bytes=vmem_limit,
        ),
        cost_estimate=cost,
    )(x2d, w_mask)

    h_tv = jnp.sum(parts[:, 0])
    w_tv = jnp.sum(parts[:, 1])

    # Cross-chunk h pairs (last row of chunk j vs first row of chunk j+1 in the
    # same plane): tiny strided-slice fix-up in plain JAX when H is tiled.
    if n_ct > 1:
        xr = x.reshape(BC, H, W).astype(jnp.float32)
        top = xr[:, Ht::Ht, :]                 # rows Ht, 2Ht, ..., (n_ct-1)*Ht
        bot = xr[:, Ht - 1:H - 1:Ht, :]        # rows Ht-1, 2Ht-1, ...
        h_tv = h_tv + jnp.sum(jnp.abs(top - bot))

    return tvloss_weight * (h_tv / count_h + w_tv / count_w) / B


def _tvl1_ref(x, tvloss_weight=1.0):
    """Pure-JAX reference mirroring the PyTorch module."""
    B, C, H, W = x.shape
    count_h = C * (H - 1) * W
    count_w = C * H * (W - 1)
    h_tv = jnp.sum(jnp.abs(x[..., 1:, :] - x[..., :-1, :]))
    w_tv = jnp.sum(jnp.abs(x[..., :, 1:] - x[..., :, :-1]))
    return tvloss_weight * (h_tv / count_h + w_tv / count_w) / B


if __name__ == "__main__":
    key = jax.random.PRNGKey(0)
    B, C, H, W = 2, 4, 16, 16
    x = jax.random.normal(key, (B, C, H, W), dtype=jnp.float32)
    out = jax.block_until_ready(tvl1_loss(x, tvloss_weight=1.0))
    ref = _tvl1_ref(x, tvloss_weight=1.0)
    assert jnp.allclose(out, ref, rtol=1e-5, atol=1e-5), (out, ref)

    # Odd sizes: non-power-of-two W, plane size not a multiple of 128.
    x2 = jax.random.normal(jax.random.PRNGKey(1), (1, 3, 7, 9), dtype=jnp.float32)
    out2 = jax.block_until_ready(tvl1_loss(x2))
    ref2 = _tvl1_ref(x2)
    assert jnp.allclose(out2, ref2, rtol=1e-5, atol=1e-5), (out2, ref2)

    # Force the H-tiled + ragged-block path on a small input (exercises the
    # chunk-boundary fix-up and the row-validity guard).
    x3 = jax.random.normal(jax.random.PRNGKey(2), (3, 1, 16, 16), dtype=jnp.float32)
    out3 = jax.block_until_ready(tvl1_loss(x3, _block_elems_override=512))
    ref3 = _tvl1_ref(x3)
    assert jnp.allclose(out3, ref3, rtol=1e-5, atol=1e-5), (out3, ref3)

    print("KERNEL_OK")
</pallas_src>

<mosaic_0001>
module attributes {stable_mosaic.version = 11 : i64} {
  func.func @_tv_kernel(%arg0: i32, %arg1: memref<8x256xf32, #tpu.memory_space<vmem>>, %arg2: memref<1x256xf32, #tpu.memory_space<vmem>>, %arg3: memref<1x2xf32, #tpu.memory_space<smem>>) attributes {dimension_semantics = [#tpu.dimension_semantics<parallel>], iteration_bounds = array<i64: 1>, scalar_prefetch = 0 : i64, scratch_operands = 0 : i64, tpu.core_type = #tpu.core_type<tc>, window_params = [{transform_indices = @transform_0, window_bounds = array<i64: 8, 256>}, {pipeline_mode = #tpu.pipeline_mode<synchronous>, transform_indices = @transform_1, window_bounds = array<i64: 1, 256>}, {transform_indices = @transform_2, window_bounds = array<i64: 1, 2>}]} {
    %c0 = arith.constant 0 : index
    %c0_0 = arith.constant 0 : index
    %0 = vector.load %arg1[%c0, %c0_0] : memref<8x256xf32, #tpu.memory_space<vmem>>, vector<8x256xf32>
    %c255_i32 = arith.constant 255 : i32
    %1 = tpu.dynamic_rotate %0 by %c255_i32 dim 1 : vector<8x256xf32>, i32 -> vector<8x256xf32>
    %2 = arith.subf %1, %0 : vector<8x256xf32>
    %3 = math.absf %2 : vector<8x256xf32>
    %c0_1 = arith.constant 0 : index
    %c0_2 = arith.constant 0 : index
    %4 = vector.load %arg2[%c0_1, %c0_2] : memref<1x256xf32, #tpu.memory_space<vmem>>, vector<1x256xf32>
    %5 = vector.broadcast %4 : vector<1x256xf32> to vector<8x256xf32>
    %6 = arith.mulf %3, %5 : vector<8x256xf32>
    %7 = vector.shape_cast %6 : vector<8x256xf32> to vector<1x8x256xf32>
    %cst = arith.constant dense<0.000000e+00> : vector<1xf32>
    %8 = vector.multi_reduction <add>, %7, %cst [1, 2] : vector<1x8x256xf32> to vector<1xf32>
    %9 = vector.shape_cast %8 : vector<1xf32> to vector<1x1x1xf32>
    %10 = vector.extract %9[0, 0, 0] : f32 from vector<1x1x1xf32>
    %11 = tpu.iota {dimensions = array<i32: 1>} : vector<1x256xi32>
    %c240_i32 = arith.constant 240 : i32
    %12 = vector.broadcast %c240_i32 : i32 to vector<1x256xi32>
    %13 = arith.cmpi slt, %11, %12 : vector<1x256xi32>
    %14 = arith.extui %13 : vector<1x256xi1> to vector<1x256xi32>
    %15 = arith.sitofp %14 : vector<1x256xi32> to vector<1x256xf32>
    %c240_i32_3 = arith.constant 240 : i32
    %16 = tpu.dynamic_rotate %0 by %c240_i32_3 dim 1 : vector<8x256xf32>, i32 -> vector<8x256xf32>
    %17 = arith.subf %16, %0 : vector<8x256xf32>
    %18 = math.absf %17 : vector<8x256xf32>
    %19 = vector.broadcast %15 : vector<1x256xf32> to vector<8x256xf32>
    %20 = arith.mulf %18, %19 : vector<8x256xf32>
    %21 = vector.shape_cast %20 : vector<8x256xf32> to vector<1x8x256xf32>
    %cst_4 = arith.constant dense<0.000000e+00> : vector<1xf32>
    %22 = vector.multi_reduction <add>, %21, %cst_4 [1, 2] : vector<1x8x256xf32> to vector<1xf32>
    %23 = vector.shape_cast %22 : vector<1xf32> to vector<1x1x1xf32>
    %24 = vector.extract %23[0, 0, 0] : f32 from vector<1x1x1xf32>
    %c0_5 = arith.constant 0 : index
    %c0_6 = arith.constant 0 : index
    %25 = memref.load %arg3[%c0_5, %c0_6] : memref<1x2xf32, #tpu.memory_space<smem>>
    memref.store %24, %arg3[%c0_5, %c0_6] : memref<1x2xf32, #tpu.memory_space<smem>>
    %c0_7 = arith.constant 0 : index
    %c1 = arith.constant 1 : index
    %26 = memref.load %arg3[%c0_7, %c1] : memref<1x2xf32, #tpu.memory_space<smem>>
    memref.store %10, %arg3[%c0_7, %c1] : memref<1x2xf32, #tpu.memory_space<smem>>
    return
  }
  func.func @transform_0(%arg0: i32) -> (i32, i32) {
    %c0_i32 = arith.constant 0 : i32
    %c0_i32_0 = arith.constant 0 : i32
    return %arg0, %c0_i32 : i32, i32
  }
  func.func @transform_1(%arg0: i32) -> (i32, i32) {
    %c0_i32 = arith.constant 0 : i32
    %c0_i32_0 = arith.constant 0 : i32
    %c0_i32_1 = arith.constant 0 : i32
    return %c0_i32, %c0_i32_0 : i32, i32
  }
  func.func @transform_2(%arg0: i32) -> (i32, i32) {
    %c0_i32 = arith.constant 0 : i32
    %c0_i32_0 = arith.constant 0 : i32
    return %arg0, %c0_i32 : i32, i32
  }
}

</mosaic_0001>

<llo_original>
// kernel: tpu_custom_call.1
$region0: #{tpu_custom_call.1}
  #allocation0 [shape = 'u32[]', space=smem, size = 0x4, offset = 0x4, fixed_abs, tag = 'smem constant byte address 0x4 - core index']
  #allocation1 [shape = 'u32[144,128]{1,0:T(1,128)}', space=vmem, size = 0x12000, scoped, tag = 'internal scratch']
  %s0 = inlined_call_operand.hbm [shape: f32[8,256], index: 0, kind: input, shape index: {}]
  %s1 = inlined_call_operand.vmem [shape: f32[1,256], index: 1, kind: input, shape index: {}]
  %s2 = inlined_call_operand.hbm [shape: f32[1,2], index: 2, kind: output, shape index: {}]
  %s3 = sld [smem:[#allocation0]]
  $region22: #{tpu_custom_call.1} parent=0
    _
  %s5 = ssub.s32 1, %s3
  %s6 = scalar_select 0, %s5, %s3
  $region1: #{tpu_custom_call.1} parent=0
    #allocation2 [shape = 'u8[8192]{0}', space=vmem, size = 0x2000, scoped, tag = 'input window, operand 0, single buffered']
    #allocation3 [shape = 's32[1]{0}', space=sflag, size = 0x4, scoped, tag = 'scoped memory for tpu_custom_call.1']
    #allocation4 [shape = 's32[1]{0}', space=sflag, size = 0x4, scoped, tag = 'scoped memory for tpu_custom_call.1']
    #allocation5 [shape = 'u8[512]{0}', space=smem, size = 0x200, scoped, tag = 'output window, operand 0, single buffered']
    %7 = vsyncpa [#allocation3], 0
    %8 = vsyncpa [#allocation4], 0
    // Predicated region
    $region2: #{tpu_custom_call.1} parent=1 // pred_check
      _
    $region3: #{tpu_custom_call.1} parent=1 // pred_check_branch
      %10 = sbr.rel (0) target = $region5
    $region4: #{tpu_custom_call.1} parent=1 // pred_region
      %s12 = ssub.s32 256, 256
      %13 = vsyncadd [#allocation3], %s12
      %s15 = sshll.u32 [#allocation2], 4
      %s16 = int_to_ptr.vmem [resolvable:$true] %s15
      %18 = dma.hbm_to_vmem [thread:$0]  %s0, 256, %s16, [#allocation3]
    $region5: #{tpu_custom_call.1} parent=1 // pred_fallthru
      _
    // Predicated region
    $region6: #{tpu_custom_call.1} parent=1 // pred_check
      _
    $region7: #{tpu_custom_call.1} parent=1 // pred_check_branch
      %20 = sbr.rel (0) target = $region9
    $region8: #{tpu_custom_call.1} parent=1 // pred_region
      _
    $region9: #{tpu_custom_call.1} parent=1 // pred_fallthru
      _
    // Predicated region
    $region10: #{tpu_custom_call.1} parent=1 // pred_check
      _
    $region11: #{tpu_custom_call.1} parent=1 // pred_check_branch
      %22 = sbr.rel (0) target = $region13
    $region12: #{tpu_custom_call.1} parent=1 // pred_region
      %23 = dma.done [#allocation3], 256
    $region13: #{tpu_custom_call.1} parent=1 // pred_fallthru
      _
    %v24 = vld [vmem:[#allocation2] sm:$0xff]
    %v25 = vld [vmem:[#allocation2 + $0x8] sm:$0xff]
    %26 = vrot.lane.b32.xlu0 %v24, 127
    %v27 = vpop.permute.xlu0 %26
    %28 = vrot.lane.b32.xlu0 %v25, 127
    %v29 = vpop.permute.xlu0 %28
    %v30 = vlaneseq
    %v31 = vand.u32 %v30, 127
    %vm32 = vcmp.lt.s32.totalorder %v31, 127
    %v33 = vsel %vm32, %v27, %v29
    %v34 = vsel %vm32, %v29, %v27
    %v35 = vsub.f32 %v33, %v24
    %v36 = vsub.f32 %v34, %v25
    %v37 = vand.u32 2147483647, %v35
    %v38 = vand.u32 2147483647, %v36
    %v39 = vld [vmem:[%s1] sm:$0x3]
    %v41 = vlaneseq
    %v42 = vshrl.u32 %v41, 7
    %v43 = vsub.s32 0, %v42
    %v44 = vrot.slane %v39, %v43
    %v45 = vlaneseq
    %v46 = vshrl.u32 %v45, 7
    %v47 = vsub.s32 1, %v46
    %v48 = vrot.slane %v39, %v47
    %v51 = vmul.f32 %v37, %v44
    %v52 = vmul.f32 %v38, %v48
    %v53 = vadd.f32 %v51, %v52
    %54 = vadd.xlane.f32.xlu0 %v53
    %v55 = vpop.xlane.xlu0 %54
    %v56 = vrot.slane %v55, 4
    %v57 = vadd.f32 %v55, %v56
    %v58 = vrot.slane %v57, 2
    %v59 = vadd.f32 %v57, %v58
    %v60 = vrot.slane %v59, 1
    %v61 = vadd.f32 %v59, %v60
    %s62 = vtos %v61
    %v63 = vadd.s32 %v31, 128
    %vm64 = vcmp.lt.s32.totalorder %v31, 240
    %vm65 = vcmp.lt.s32.totalorder %v63, 240
    %v66 = vsel %vm64, 1, 0
    %v67 = vsel %vm65, 1, 0
    %v68 = vcvt.s32.f32 %v66
    %v69 = vcvt.s32.f32 %v67
    %70 = vrot.lane.b32.xlu0 %v24, 112
    %v71 = vpop.permute.xlu0 %70
    %72 = vrot.lane.b32.xlu0 %v25, 112
    %v73 = vpop.permute.xlu0 %72
    %vm74 = vcmp.lt.s32.totalorder %v31, 112
    %v75 = vsel %vm74, %v71, %v73
    %v76 = vsel %vm74, %v73, %v71
    %v77 = vsub.f32 %v75, %v24
    %v78 = vsub.f32 %v76, %v25
    %v79 = vand.u32 2147483647, %v77
    %v80 = vand.u32 2147483647, %v78
    %v81 = vmul.f32 %v79, %v68
    %v82 = vmul.f32 %v80, %v69
    %v83 = vadd.f32 %v81, %v82
    %84 = vadd.xlane.f32.xlu0 %v83
    %v85 = vpop.xlane.xlu0 %84
    %v86 = vrot.slane %v85, 4
    %v87 = vadd.f32 %v85, %v86
    %v88 = vrot.slane %v87, 2
    %v89 = vadd.f32 %v87, %v88
    %v90 = vrot.slane %v89, 1
    %v91 = vadd.f32 %v89, %v90
    %s92 = vtos %v91
    %s93 = scalar_lea.smem [#allocation5], 0
    %94 = sst [smem:[%s93]] %s92
    %s95 = scalar_lea.smem [#allocation5], 1
    %96 = sst [smem:[%s95]] %s62
    // Predicated region
    $region14: #{tpu_custom_call.1} parent=1 // pred_check
      _
    $region15: #{tpu_custom_call.1} parent=1 // pred_check_branch
      %98 = sbr.rel (0) target = $region17
    $region16: #{tpu_custom_call.1} parent=1 // pred_region
      %s100 = ssub.s32 16, 16
      %101 = vsyncadd [#allocation4], %s100
      %104 = dma.smem_to_hbm [#allocation5], 16, %s2, [#allocation4]
    $region17: #{tpu_custom_call.1} parent=1 // pred_fallthru
      _
    // Predicated region
    $region18: #{tpu_custom_call.1} parent=1 // pred_check
      _
    $region19: #{tpu_custom_call.1} parent=1 // pred_check_branch
      %106 = sbr.rel (0) target = $region21
    $region20: #{tpu_custom_call.1} parent=1 // pred_region
      %107 = dma.done [#allocation4], 16
    $region21: #{tpu_custom_call.1} parent=1 // pred_fallthru
      _
    %108 = sfence
    %109 = vsyncpa [#allocation3], 1
    %110 = vsyncpa [#allocation4], 1

</llo_original>
